<compile_context>
chip_gen: v7x
topology: tpu7x:2x2x1
jax: 0.10.0
libtpu: 0.0.40
codegen_flags: <defaults>
</compile_context>

<pallas_src>
import jax
import jax.numpy as jnp
from jax import lax
from jax.experimental import pallas as pl
from jax.experimental.pallas import tpu as pltpu

ALPHA = 0.95


def _make_kernel(alpha):
    alpha = float(alpha)

    def kernel(x_ref, g_ref, z_ref, b_ref, xs_ref, zs_ref):
        """One grid step == one (batch-tile, neuron-tile, time-chunk).

        x_ref : (tb, tt, tn)  input chunk (native B,T,N layout)
        g_ref : (1, tn)       precomputed (1 - alpha) * reset_gamma (f32)
        z_ref : (tb, tt, tn)  output spikes
        b_ref : (tb, tn) f32  adaptive-threshold state (persists across T chunks)
        xs_ref: (tt, tb, tn) f32      time-major staging of x
        zs_ref: (tt, tb, tn) out-dt   time-major staging of z
        """
        # New (batch-tile, neuron-tile) sequence starts -> reset state (b0 == 0).
        @pl.when(pl.program_id(2) == 0)
        def _():
            b_ref[...] = jnp.zeros_like(b_ref)

        # One relayout per chunk: (tb, tt, tn) -> time-major (tt, tb, tn).
        xs_ref[...] = pltpu.einshape("btn->tbn", x_ref[...]).astype(jnp.float32)

        tb, tn = b_ref.shape
        tt = xs_ref.shape[0]

        # Hoisted loop invariants (JAX does not CSE broadcast_in_dim).
        g_b = jnp.broadcast_to(g_ref[...], (tb, tn))

        def body(i, b):
            xt = xs_ref[i]                       # dense (tb, tn) slab
            s = jnp.where(xt > b, 1.0, 0.0)      # spike, computed once in f32
            zs_ref[i] = s.astype(zs_ref.dtype)   # dense leading-axis store
            # threshold for the *next* timestep: alpha*b + (1-alpha)*z_t*gamma
            return alpha * b + s * g_b

        b_ref[...] = lax.fori_loop(0, tt, body, b_ref[...],
                                   unroll=min(8, max(tt, 1)))

        # One relayout back into the output block.
        z_ref[...] = pltpu.einshape("tbn->btn", zs_ref[...])

    return kernel


def _pick_tiles(B, T, N):
    LANE = 128
    # Lane (N) dim: lane-dense divisor tile when aligned, else the full dim
    # (block dim equal to the array dim is always legal).
    if N % LANE == 0:
        if N % 512 == 0:
            tn = 512
        elif N % 256 == 0:
            tn = 256
        else:
            tn = 128
    else:
        tn = N
    # Time chunk (sublane dim of the block): multiple of 8 or the full dim.
    tt = T if T <= 128 else 128
    # Batch tile (leading block dim, no alignment constraint).
    tb = min(B, 8)
    # v7x megacore: expose >= 2 parallel (B x N) tiles when possible.
    if pl.cdiv(B, tb) * pl.cdiv(N, tn) < 2:
        if tn % 256 == 0:          # stays a multiple of 128 lanes
            tn //= 2
        elif B >= 2:
            tb = (B + 1) // 2
    return tb, tt, tn


def adapt_spike_forward(x, reset_gamma, alpha=ALPHA):
    """x: (B, T, N), reset_gamma: (N,) -> z: (B, T, N) of x.dtype."""
    B, T, N = x.shape
    out_dtype = x.dtype

    tb, tt, tn = _pick_tiles(B, T, N)
    grid = (pl.cdiv(B, tb), pl.cdiv(N, tn), pl.cdiv(T, tt))

    # Loop-invariant hoist: (1 - alpha) * gamma, same alpha as the decay term.
    g2d = ((1.0 - float(alpha)) * reset_gamma.astype(jnp.float32)).reshape(1, N)

    # Explicit VMEM budget: double-buffered x + z blocks, two time-major
    # staging scratches, the state vector, and headroom.
    in_sz = jnp.dtype(x.dtype).itemsize
    out_sz = jnp.dtype(out_dtype).itemsize
    blk = tb * tt * tn
    need = (2 * blk * in_sz + 2 * blk * out_sz        # pipelined x / z blocks
            + blk * 4 + blk * out_sz                  # staging scratches
            + tb * tn * 4 + 2 * tn * 4)               # b state + g
    vmem_limit = int(min(max(need + (4 << 20), 16 << 20), 48 << 20))

    kernel = _make_kernel(alpha)

    z = pl.pallas_call(
        kernel,
        out_shape=jax.ShapeDtypeStruct((B, T, N), out_dtype),
        grid_spec=pltpu.PrefetchScalarGridSpec(
            num_scalar_prefetch=0,
            grid=grid,
            in_specs=[
                # native (B, T, N) layout: block indices (b, t, n)
                pl.BlockSpec((tb, tt, tn), lambda b, n, t: (b, t, n)),
                # (1-alpha)*gamma tile, resident across B and T
                pl.BlockSpec((1, tn), lambda b, n, t: (0, n)),
            ],
            out_specs=pl.BlockSpec((tb, tt, tn), lambda b, n, t: (b, t, n)),
            scratch_shapes=[
                pltpu.VMEM((tb, tn), jnp.float32),      # adaptive threshold b
                pltpu.VMEM((tt, tb, tn), jnp.float32),  # time-major x staging
                pltpu.VMEM((tt, tb, tn), out_dtype),    # time-major z staging
            ],
        ),
        compiler_params=pltpu.CompilerParams(
            # B / N tiles are independent (megacore); T is the recurrence axis.
            dimension_semantics=("parallel", "parallel", "arbitrary"),
            vmem_limit_bytes=vmem_limit,
        ),
    )(x, g2d)
    return z


def adapt_spike_reference(x, reset_gamma, alpha=ALPHA):
    """Pure-JAX reference of the PyTorch forward (inference path)."""
    B, T, N = x.shape
    b = jnp.zeros((B, N), dtype=jnp.float32)
    z_list = [(x[:, 0, :] > 0).astype(x.dtype)]
    for t in range(1, T):
        b = alpha * b + (1.0 - alpha) * (z_list[-1].astype(jnp.float32)
                                         * reset_gamma[None, :])
        z_list.append(((x[:, t, :].astype(jnp.float32) - b) > 0).astype(x.dtype))
    return jnp.stack(z_list, axis=1)


if __name__ == "__main__":
    key = jax.random.PRNGKey(0)

    # --- primary small-shape check (B, T, N) -------------------------------
    B, T, N = 2, 8, 32
    x = jax.random.normal(key, (B, T, N), dtype=jnp.float32)
    reset_gamma = jnp.ones((N,), dtype=jnp.float32)   # nn.Parameter(torch.ones(N))

    z = adapt_spike_forward(x, reset_gamma)
    jax.block_until_ready(z)
    z_ref = adapt_spike_reference(x, reset_gamma)
    assert z.shape == (B, T, N)
    assert jnp.allclose(z, z_ref, atol=1e-6), "mismatch vs reference (small shape)"

    # --- secondary check: T chunking, ragged B/T edge blocks, multi-tile ---
    B2, T2, N2 = 10, 150, 256
    x2 = jax.random.normal(jax.random.PRNGKey(1), (B2, T2, N2), dtype=jnp.float32)
    gamma2 = jnp.ones((N2,), dtype=jnp.float32)
    z2 = adapt_spike_forward(x2, gamma2)
    jax.block_until_ready(z2)
    z2_ref = adapt_spike_reference(x2, gamma2)
    assert jnp.allclose(z2, z2_ref, atol=1e-6), "mismatch vs reference (chunked shape)"

    print("KERNEL_OK")
</pallas_src>

<mosaic_0001>
module attributes {stable_mosaic.version = 11 : i64} {
  func.func @kernel(%arg0: i32, %arg1: i32, %arg2: i32, %arg3: memref<1x8x32xf32, #tpu.memory_space<vmem>>, %arg4: memref<1x32xf32, #tpu.memory_space<vmem>>, %arg5: memref<1x8x32xf32, #tpu.memory_space<vmem>>, %arg6: memref<1x32xf32, #tpu.memory_space<vmem>>, %arg7: memref<8x1x32xf32, #tpu.memory_space<vmem>>, %arg8: memref<8x1x32xf32, #tpu.memory_space<vmem>>) attributes {dimension_semantics = [#tpu.dimension_semantics<parallel>, #tpu.dimension_semantics<parallel>, #tpu.dimension_semantics<arbitrary>], iteration_bounds = array<i64: 2, 1, 1>, scalar_prefetch = 0 : i64, scratch_operands = 3 : i64, tpu.core_type = #tpu.core_type<tc>, window_params = [{transform_indices = @transform_0, window_bounds = array<i64: 1, 8, 32>}, {transform_indices = @transform_1, window_bounds = array<i64: 1, 32>}, {transform_indices = @transform_2, window_bounds = array<i64: 1, 8, 32>}]} {
    %c0_i32 = arith.constant 0 : i32
    %0 = arith.cmpi eq, %arg2, %c0_i32 : i32
    %1 = arith.extui %0 : i1 to i32
    %c0_i32_0 = arith.constant 0 : i32
    %2 = arith.cmpi ne, %1, %c0_i32_0 : i32
    scf.if %2 {
      %cst_74 = arith.constant 0.000000e+00 : f32
      %132 = vector.broadcast %cst_74 : f32 to vector<1x32xf32>
      %c0_75 = arith.constant 0 : index
      %c0_76 = arith.constant 0 : index
      %133 = vector.load %arg6[%c0_75, %c0_76] : memref<1x32xf32, #tpu.memory_space<vmem>>, vector<1x32xf32>
      tpu.vector_store %arg6[%c0_75, %c0_76], %132 {strides = array<i32>} : memref<1x32xf32, #tpu.memory_space<vmem>>, vector<1x32xf32>,
    } else {
    }
    %c0 = arith.constant 0 : index
    %c0_1 = arith.constant 0 : index
    %c0_2 = arith.constant 0 : index
    %3 = vector.load %arg3[%c0, %c0_1, %c0_2] : memref<1x8x32xf32, #tpu.memory_space<vmem>>, vector<1x8x32xf32>
    %4 = tpu.transpose %3, [1, 0, 2] : vector<1x8x32xf32> -> vector<8x1x32xf32>
    %c0_3 = arith.constant 0 : index
    %c0_4 = arith.constant 0 : index
    %c0_5 = arith.constant 0 : index
    %5 = vector.load %arg7[%c0_3, %c0_4, %c0_5] : memref<8x1x32xf32, #tpu.memory_space<vmem>>, vector<8x1x32xf32>
    tpu.vector_store %arg7[%c0_3, %c0_4, %c0_5], %4 {strides = array<i32>} : memref<8x1x32xf32, #tpu.memory_space<vmem>>, vector<8x1x32xf32>,
    %c0_6 = arith.constant 0 : index
    %c0_7 = arith.constant 0 : index
    %6 = vector.load %arg4[%c0_6, %c0_7] : memref<1x32xf32, #tpu.memory_space<vmem>>, vector<1x32xf32>
    %c0_8 = arith.constant 0 : index
    %c0_9 = arith.constant 0 : index
    %7 = vector.load %arg6[%c0_8, %c0_9] : memref<1x32xf32, #tpu.memory_space<vmem>>, vector<1x32xf32>
    %c0_i32_10 = arith.constant 0 : i32
    %8 = arith.index_cast %c0_i32_10 : i32 to index
    %c0_11 = arith.constant 0 : index
    %c0_12 = arith.constant 0 : index
    %9 = vector.load %arg7[%8, %c0_11, %c0_12] : memref<8x1x32xf32, #tpu.memory_space<vmem>>, vector<1x1x32xf32>
    %10 = vector.shape_cast %9 : vector<1x1x32xf32> to vector<1x32xf32>
    %11 = arith.cmpf ogt, %10, %7 : vector<1x32xf32>
    %cst = arith.constant 1.000000e+00 : f32
    %cst_13 = arith.constant 0.000000e+00 : f32
    %12 = vector.broadcast %cst : f32 to vector<1x32xf32>
    %13 = vector.broadcast %cst_13 : f32 to vector<1x32xf32>
    %14 = arith.select %11, %12, %13 : vector<1x32xi1>, vector<1x32xf32>
    %15 = arith.index_cast %c0_i32_10 : i32 to index
    %c0_14 = arith.constant 0 : index
    %c0_15 = arith.constant 0 : index
    %16 = vector.load %arg8[%15, %c0_14, %c0_15] : memref<8x1x32xf32, #tpu.memory_space<vmem>>, vector<1x1x32xf32>
    %17 = vector.shape_cast %16 : vector<1x1x32xf32> to vector<1x32xf32>
    %18 = vector.shape_cast %14 : vector<1x32xf32> to vector<1x1x32xf32>
    tpu.vector_store %arg8[%15, %c0_14, %c0_15], %18 {strides = array<i32>} : memref<8x1x32xf32, #tpu.memory_space<vmem>>, vector<1x1x32xf32>,
    %cst_16 = arith.constant 0.949999988 : f32
    %19 = vector.broadcast %cst_16 : f32 to vector<1x32xf32>
    %20 = arith.mulf %19, %7 : vector<1x32xf32>
    %21 = arith.mulf %14, %6 : vector<1x32xf32>
    %22 = arith.addf %20, %21 : vector<1x32xf32>
    %c1_i32 = arith.constant 1 : i32
    %23 = arith.index_cast %c1_i32 : i32 to index
    %c0_17 = arith.constant 0 : index
    %c0_18 = arith.constant 0 : index
    %24 = vector.load %arg7[%23, %c0_17, %c0_18] : memref<8x1x32xf32, #tpu.memory_space<vmem>>, vector<1x1x32xf32>
    %25 = vector.shape_cast %24 : vector<1x1x32xf32> to vector<1x32xf32>
    %26 = arith.cmpf ogt, %25, %22 : vector<1x32xf32>
    %cst_19 = arith.constant 1.000000e+00 : f32
    %cst_20 = arith.constant 0.000000e+00 : f32
    %27 = vector.broadcast %cst_19 : f32 to vector<1x32xf32>
    %28 = vector.broadcast %cst_20 : f32 to vector<1x32xf32>
    %29 = arith.select %26, %27, %28 : vector<1x32xi1>, vector<1x32xf32>
    %30 = arith.index_cast %c1_i32 : i32 to index
    %c0_21 = arith.constant 0 : index
    %c0_22 = arith.constant 0 : index
    %31 = vector.load %arg8[%30, %c0_21, %c0_22] : memref<8x1x32xf32, #tpu.memory_space<vmem>>, vector<1x1x32xf32>
    %32 = vector.shape_cast %31 : vector<1x1x32xf32> to vector<1x32xf32>
    %33 = vector.shape_cast %29 : vector<1x32xf32> to vector<1x1x32xf32>
    tpu.vector_store %arg8[%30, %c0_21, %c0_22], %33 {strides = array<i32>} : memref<8x1x32xf32, #tpu.memory_space<vmem>>, vector<1x1x32xf32>,
    %cst_23 = arith.constant 0.949999988 : f32
    %34 = vector.broadcast %cst_23 : f32 to vector<1x32xf32>
    %35 = arith.mulf %34, %22 : vector<1x32xf32>
    %36 = arith.mulf %29, %6 : vector<1x32xf32>
    %37 = arith.addf %35, %36 : vector<1x32xf32>
    %c2_i32 = arith.constant 2 : i32
    %38 = arith.index_cast %c2_i32 : i32 to index
    %c0_24 = arith.constant 0 : index
    %c0_25 = arith.constant 0 : index
    %39 = vector.load %arg7[%38, %c0_24, %c0_25] : memref<8x1x32xf32, #tpu.memory_space<vmem>>, vector<1x1x32xf32>
    %40 = vector.shape_cast %39 : vector<1x1x32xf32> to vector<1x32xf32>
    %41 = arith.cmpf ogt, %40, %37 : vector<1x32xf32>
    %cst_26 = arith.constant 1.000000e+00 : f32
    %cst_27 = arith.constant 0.000000e+00 : f32
    %42 = vector.broadcast %cst_26 : f32 to vector<1x32xf32>
    %43 = vector.broadcast %cst_27 : f32 to vector<1x32xf32>
    %44 = arith.select %41, %42, %43 : vector<1x32xi1>, vector<1x32xf32>
    %45 = arith.index_cast %c2_i32 : i32 to index
    %c0_28 = arith.constant 0 : index
    %c0_29 = arith.constant 0 : index
    %46 = vector.load %arg8[%45, %c0_28, %c0_29] : memref<8x1x32xf32, #tpu.memory_space<vmem>>, vector<1x1x32xf32>
    %47 = vector.shape_cast %46 : vector<1x1x32xf32> to vector<1x32xf32>
    %48 = vector.shape_cast %44 : vector<1x32xf32> to vector<1x1x32xf32>
    tpu.vector_store %arg8[%45, %c0_28, %c0_29], %48 {strides = array<i32>} : memref<8x1x32xf32, #tpu.memory_space<vmem>>, vector<1x1x32xf32>,
    %cst_30 = arith.constant 0.949999988 : f32
    %49 = vector.broadcast %cst_30 : f32 to vector<1x32xf32>
    %50 = arith.mulf %49, %37 : vector<1x32xf32>
    %51 = arith.mulf %44, %6 : vector<1x32xf32>
    %52 = arith.addf %50, %51 : vector<1x32xf32>
    %c3_i32 = arith.constant 3 : i32
    %53 = arith.index_cast %c3_i32 : i32 to index
    %c0_31 = arith.constant 0 : index
    %c0_32 = arith.constant 0 : index
    %54 = vector.load %arg7[%53, %c0_31, %c0_32] : memref<8x1x32xf32, #tpu.memory_space<vmem>>, vector<1x1x32xf32>
    %55 = vector.shape_cast %54 : vector<1x1x32xf32> to vector<1x32xf32>
    %56 = arith.cmpf ogt, %55, %52 : vector<1x32xf32>
    %cst_33 = arith.constant 1.000000e+00 : f32
    %cst_34 = arith.constant 0.000000e+00 : f32
    %57 = vector.broadcast %cst_33 : f32 to vector<1x32xf32>
    %58 = vector.broadcast %cst_34 : f32 to vector<1x32xf32>
    %59 = arith.select %56, %57, %58 : vector<1x32xi1>, vector<1x32xf32>
    %60 = arith.index_cast %c3_i32 : i32 to index
    %c0_35 = arith.constant 0 : index
    %c0_36 = arith.constant 0 : index
    %61 = vector.load %arg8[%60, %c0_35, %c0_36] : memref<8x1x32xf32, #tpu.memory_space<vmem>>, vector<1x1x32xf32>
    %62 = vector.shape_cast %61 : vector<1x1x32xf32> to vector<1x32xf32>
    %63 = vector.shape_cast %59 : vector<1x32xf32> to vector<1x1x32xf32>
    tpu.vector_store %arg8[%60, %c0_35, %c0_36], %63 {strides = array<i32>} : memref<8x1x32xf32, #tpu.memory_space<vmem>>, vector<1x1x32xf32>,
    %cst_37 = arith.constant 0.949999988 : f32
    %64 = vector.broadcast %cst_37 : f32 to vector<1x32xf32>
    %65 = arith.mulf %64, %52 : vector<1x32xf32>
    %66 = arith.mulf %59, %6 : vector<1x32xf32>
    %67 = arith.addf %65, %66 : vector<1x32xf32>
    %c4_i32 = arith.constant 4 : i32
    %68 = arith.index_cast %c4_i32 : i32 to index
    %c0_38 = arith.constant 0 : index
    %c0_39 = arith.constant 0 : index
    %69 = vector.load %arg7[%68, %c0_38, %c0_39] : memref<8x1x32xf32, #tpu.memory_space<vmem>>, vector<1x1x32xf32>
    %70 = vector.shape_cast %69 : vector<1x1x32xf32> to vector<1x32xf32>
    %71 = arith.cmpf ogt, %70, %67 : vector<1x32xf32>
    %cst_40 = arith.constant 1.000000e+00 : f32
    %cst_41 = arith.constant 0.000000e+00 : f32
    %72 = vector.broadcast %cst_40 : f32 to vector<1x32xf32>
    %73 = vector.broadcast %cst_41 : f32 to vector<1x32xf32>
    %74 = arith.select %71, %72, %73 : vector<1x32xi1>, vector<1x32xf32>
    %75 = arith.index_cast %c4_i32 : i32 to index
    %c0_42 = arith.constant 0 : index
    %c0_43 = arith.constant 0 : index
    %76 = vector.load %arg8[%75, %c0_42, %c0_43] : memref<8x1x32xf32, #tpu.memory_space<vmem>>, vector<1x1x32xf32>
    %77 = vector.shape_cast %76 : vector<1x1x32xf32> to vector<1x32xf32>
    %78 = vector.shape_cast %74 : vector<1x32xf32> to vector<1x1x32xf32>
    tpu.vector_store %arg8[%75, %c0_42, %c0_43], %78 {strides = array<i32>} : memref<8x1x32xf32, #tpu.memory_space<vmem>>, vector<1x1x32xf32>,
    %cst_44 = arith.constant 0.949999988 : f32
    %79 = vector.broadcast %cst_44 : f32 to vector<1x32xf32>
    %80 = arith.mulf %79, %67 : vector<1x32xf32>
    %81 = arith.mulf %74, %6 : vector<1x32xf32>
    %82 = arith.addf %80, %81 : vector<1x32xf32>
    %c5_i32 = arith.constant 5 : i32
    %83 = arith.index_cast %c5_i32 : i32 to index
    %c0_45 = arith.constant 0 : index
    %c0_46 = arith.constant 0 : index
    %84 = vector.load %arg7[%83, %c0_45, %c0_46] : memref<8x1x32xf32, #tpu.memory_space<vmem>>, vector<1x1x32xf32>
    %85 = vector.shape_cast %84 : vector<1x1x32xf32> to vector<1x32xf32>
    %86 = arith.cmpf ogt, %85, %82 : vector<1x32xf32>
    %cst_47 = arith.constant 1.000000e+00 : f32
    %cst_48 = arith.constant 0.000000e+00 : f32
    %87 = vector.broadcast %cst_47 : f32 to vector<1x32xf32>
    %88 = vector.broadcast %cst_48 : f32 to vector<1x32xf32>
    %89 = arith.select %86, %87, %88 : vector<1x32xi1>, vector<1x32xf32>
    %90 = arith.index_cast %c5_i32 : i32 to index
    %c0_49 = arith.constant 0 : index
    %c0_50 = arith.constant 0 : index
    %91 = vector.load %arg8[%90, %c0_49, %c0_50] : memref<8x1x32xf32, #tpu.memory_space<vmem>>, vector<1x1x32xf32>
    %92 = vector.shape_cast %91 : vector<1x1x32xf32> to vector<1x32xf32>
    %93 = vector.shape_cast %89 : vector<1x32xf32> to vector<1x1x32xf32>
    tpu.vector_store %arg8[%90, %c0_49, %c0_50], %93 {strides = array<i32>} : memref<8x1x32xf32, #tpu.memory_space<vmem>>, vector<1x1x32xf32>,
    %cst_51 = arith.constant 0.949999988 : f32
    %94 = vector.broadcast %cst_51 : f32 to vector<1x32xf32>
    %95 = arith.mulf %94, %82 : vector<1x32xf32>
    %96 = arith.mulf %89, %6 : vector<1x32xf32>
    %97 = arith.addf %95, %96 : vector<1x32xf32>
    %c6_i32 = arith.constant 6 : i32
    %98 = arith.index_cast %c6_i32 : i32 to index
    %c0_52 = arith.constant 0 : index
    %c0_53 = arith.constant 0 : index
    %99 = vector.load %arg7[%98, %c0_52, %c0_53] : memref<8x1x32xf32, #tpu.memory_space<vmem>>, vector<1x1x32xf32>
    %100 = vector.shape_cast %99 : vector<1x1x32xf32> to vector<1x32xf32>
    %101 = arith.cmpf ogt, %100, %97 : vector<1x32xf32>
    %cst_54 = arith.constant 1.000000e+00 : f32
    %cst_55 = arith.constant 0.000000e+00 : f32
    %102 = vector.broadcast %cst_54 : f32 to vector<1x32xf32>
    %103 = vector.broadcast %cst_55 : f32 to vector<1x32xf32>
    %104 = arith.select %101, %102, %103 : vector<1x32xi1>, vector<1x32xf32>
    %105 = arith.index_cast %c6_i32 : i32 to index
    %c0_56 = arith.constant 0 : index
    %c0_57 = arith.constant 0 : index
    %106 = vector.load %arg8[%105, %c0_56, %c0_57] : memref<8x1x32xf32, #tpu.memory_space<vmem>>, vector<1x1x32xf32>
    %107 = vector.shape_cast %106 : vector<1x1x32xf32> to vector<1x32xf32>
    %108 = vector.shape_cast %104 : vector<1x32xf32> to vector<1x1x32xf32>
    tpu.vector_store %arg8[%105, %c0_56, %c0_57], %108 {strides = array<i32>} : memref<8x1x32xf32, #tpu.memory_space<vmem>>, vector<1x1x32xf32>,
    %cst_58 = arith.constant 0.949999988 : f32
    %109 = vector.broadcast %cst_58 : f32 to vector<1x32xf32>
    %110 = arith.mulf %109, %97 : vector<1x32xf32>
    %111 = arith.mulf %104, %6 : vector<1x32xf32>
    %112 = arith.addf %110, %111 : vector<1x32xf32>
    %c7_i32 = arith.constant 7 : i32
    %113 = arith.index_cast %c7_i32 : i32 to index
    %c0_59 = arith.constant 0 : index
    %c0_60 = arith.constant 0 : index
    %114 = vector.load %arg7[%113, %c0_59, %c0_60] : memref<8x1x32xf32, #tpu.memory_space<vmem>>, vector<1x1x32xf32>
    %115 = vector.shape_cast %114 : vector<1x1x32xf32> to vector<1x32xf32>
    %116 = arith.cmpf ogt, %115, %112 : vector<1x32xf32>
    %cst_61 = arith.constant 1.000000e+00 : f32
    %cst_62 = arith.constant 0.000000e+00 : f32
    %117 = vector.broadcast %cst_61 : f32 to vector<1x32xf32>
    %118 = vector.broadcast %cst_62 : f32 to vector<1x32xf32>
    %119 = arith.select %116, %117, %118 : vector<1x32xi1>, vector<1x32xf32>
    %120 = arith.index_cast %c7_i32 : i32 to index
    %c0_63 = arith.constant 0 : index
    %c0_64 = arith.constant 0 : index
    %121 = vector.load %arg8[%120, %c0_63, %c0_64] : memref<8x1x32xf32, #tpu.memory_space<vmem>>, vector<1x1x32xf32>
    %122 = vector.shape_cast %121 : vector<1x1x32xf32> to vector<1x32xf32>
    %123 = vector.shape_cast %119 : vector<1x32xf32> to vector<1x1x32xf32>
    tpu.vector_store %arg8[%120, %c0_63, %c0_64], %123 {strides = array<i32>} : memref<8x1x32xf32, #tpu.memory_space<vmem>>, vector<1x1x32xf32>,
    %cst_65 = arith.constant 0.949999988 : f32
    %124 = vector.broadcast %cst_65 : f32 to vector<1x32xf32>
    %125 = arith.mulf %124, %112 : vector<1x32xf32>
    %126 = arith.mulf %119, %6 : vector<1x32xf32>
    %127 = arith.addf %125, %126 : vector<1x32xf32>
    %c8_i32 = arith.constant 8 : i32
    %c0_66 = arith.constant 0 : index
    %c0_67 = arith.constant 0 : index
    %128 = vector.load %arg6[%c0_66, %c0_67] : memref<1x32xf32, #tpu.memory_space<vmem>>, vector<1x32xf32>
    tpu.vector_store %arg6[%c0_66, %c0_67], %127 {strides = array<i32>} : memref<1x32xf32, #tpu.memory_space<vmem>>, vector<1x32xf32>,
    %c0_68 = arith.constant 0 : index
    %c0_69 = arith.constant 0 : index
    %c0_70 = arith.constant 0 : index
    %129 = vector.load %arg8[%c0_68, %c0_69, %c0_70] : memref<8x1x32xf32, #tpu.memory_space<vmem>>, vector<8x1x32xf32>
    %130 = tpu.transpose %129, [1, 0, 2] : vector<8x1x32xf32> -> vector<1x8x32xf32>
    %c0_71 = arith.constant 0 : index
    %c0_72 = arith.constant 0 : index
    %c0_73 = arith.constant 0 : index
    %131 = vector.load %arg5[%c0_71, %c0_72, %c0_73] : memref<1x8x32xf32, #tpu.memory_space<vmem>>, vector<1x8x32xf32>
    tpu.vector_store %arg5[%c0_71, %c0_72, %c0_73], %130 {strides = array<i32>} : memref<1x8x32xf32, #tpu.memory_space<vmem>>, vector<1x8x32xf32>,
    return
  }
  func.func @transform_0(%arg0: i32, %arg1: i32, %arg2: i32) -> (i32, i32, i32) {
    %c0_i32 = arith.constant 0 : i32
    return %arg0, %arg2, %arg1 : i32, i32, i32
  }
  func.func @transform_1(%arg0: i32, %arg1: i32, %arg2: i32) -> (i32, i32) {
    %c0_i32 = arith.constant 0 : i32
    %c0_i32_0 = arith.constant 0 : i32
    return %c0_i32, %arg1 : i32, i32
  }
  func.func @transform_2(%arg0: i32, %arg1: i32, %arg2: i32) -> (i32, i32, i32) {
    %c0_i32 = arith.constant 0 : i32
    return %arg0, %arg2, %arg1 : i32, i32, i32
  }
}

</mosaic_0001>

<llo_original>
// kernel: tpu_custom_call.1
$region0: #{tpu_custom_call.1}
  #allocation0 [shape = 'u32[]', space=smem, size = 0x4, offset = 0x4, fixed_abs, tag = 'smem constant byte address 0x4 - core index']
  #allocation1 [shape = 'u32[144,128]{1,0:T(1,128)}', space=vmem, size = 0x12000, scoped, tag = 'internal scratch']
  #allocation2 [shape = 'f32[1,32]{1,0:T(1,128)}', space=vmem, size = 0x200, scoped, tag = 'scratch operand']
  #allocation3 [shape = 'f32[8,1,32]{2,1,0:T(1,128)}', space=vmem, size = 0x1000, scoped, tag = 'scratch operand']
  #allocation4 [shape = 'f32[8,1,32]{2,1,0:T(1,128)}', space=vmem, size = 0x1000, scoped, tag = 'scratch operand']
  %s0 = inlined_call_operand.hbm [shape: f32[2,8,32], index: 0, kind: input, shape index: {}]
  %s1 = inlined_call_operand.vmem [shape: f32[1,32], index: 1, kind: input, shape index: {}]
  %s2 = inlined_call_operand.hbm [shape: f32[2,8,32], index: 2, kind: output, shape index: {}]
  %s3 = sld [smem:[#allocation0]]
  $region49: #{tpu_custom_call.1} parent=0
    _
  %s5 = ssub.s32 1, %s3
  %s6 = scalar_select 0, %s5, %s3
  $region1: #{tpu_custom_call.1} parent=0
    #allocation5 [shape = 'u8[8192]{0}', space=vmem, size = 0x2000, scoped, tag = 'input window, operand 0']
    #allocation6 [shape = 's32[2]{0}', space=sflag, size = 0x8, scoped, tag = 'scoped memory for tpu_custom_call.1']
    #allocation7 [shape = 's32[2]{0}', space=sflag, size = 0x8, scoped, tag = 'scoped memory for tpu_custom_call.1']
    #allocation8 [shape = 'u8[8192]{0}', space=vmem, size = 0x2000, scoped, tag = 'output window, operand 0']
    %7 = vsyncpa [#allocation6], 0
    %s8 = scalar_lea.sflag [#allocation6], 1
    %9 = vsyncpa %s8, 0
    %10 = vsyncpa [#allocation7], 0
    %s11 = scalar_lea.sflag [#allocation7], 1
    %12 = vsyncpa %s11, 0
    loop: start=0, step=1, limit=4
    $region2: #{tpu_custom_call.1} parent=1 // loop_pre_header
      _
    $region3: #{tpu_custom_call.1} parent=1 // loop_header
      %s14 = sphi 0, %s18
      %p15 = scmp.ge.s32.totalorder %s14, 4
      %s21 = sphi 0, %s40
      %s22 = sphi 0, %s36
      %s23 = sphi 0, %s32
      %s24 = sphi 0, %s21
      %s25 = sphi 0, %s22
      %s26 = sphi 0, %s23
      %s27 = sphi 0, %s24
      %s28 = sphi 0, %s25
      %s29 = sphi 0, %s26
      %s47 = sphi 0, %s49
      %s50 = sphi 0, %s47
      %s51 = sphi 0, %s50
      %s67 = sphi 0, %s51
      %s73 = sphi 0, %s75
      %s76 = sphi 0, %s73
      %s77 = sphi 0, %s76
      %s93 = sphi 0, %s77
      %s103 = sphi 0, %s105
      %s106 = sphi 0, %s103
      %s107 = sphi 0, %s106
      %s123 = sphi 0, %s107
    $region4: #{tpu_custom_call.1} parent=1 // loop_header_branch
      %17 = sbr.rel (%p15) target = $region8
    $region5: #{tpu_custom_call.1} parent=1 // loop_body
      %s19 = ssub.s32 %s14, 1
      %s20 = ssub.s32 %s14, 2
      %s30 = sadd.s32 1, %s23
      %p31 = scmp.ge.s32.totalorder %s30, 1
      %s32 = scalar_select %p31, 0, %s30
      %s33 = sadd.s32 1, %s22
      %s34 = scalar_select %p31, %s33, %s22
      %p35 = scmp.ge.s32.totalorder %s34, 1
      %s36 = scalar_select %p35, 0, %s34
      %s37 = sadd.s32 1, %s21
      %s38 = scalar_select %p35, %s37, %s21
      %p39 = scmp.ge.s32.totalorder %s38, 2
      %s40 = scalar_select %p39, 0, %s38
      %s41 = ssub.s32 %s21, %s40
      %s42 = ssub.s32 %s23, %s32
      %s43 = sor.u32 %s41, %s42
      %s44 = ssub.s32 %s22, %s36
      %s45 = sor.u32 %s43, %s44
      %p46 = scmp.eq.s32.totalorder %s45, 0
      %s48 = sadd.s32 %s47, 1
      %s49 = scalar_select %p46, %s47, %s48
      %p52 = pneg %p46
      %p53 = scmp.eq.s32.totalorder %s14, 1
      %p54 = por %p52, %p53
      %p55 = scmp.ne.s32.totalorder %s47, %s50
      %p56 = scmp.eq.s32.totalorder %s14, 0
      %p57 = por %p55, %p56
      %p58 = scmp.ne.s32.totalorder %s47, %s50
      %p59 = scmp.eq.s32.totalorder %s19, 1
      %p60 = por %p58, %p59
      %p61 = scmp.ne.s32.totalorder %s50, %s51
      %p62 = scmp.eq.s32.totalorder %s19, 0
      %p63 = por %p61, %p62
      %p64 = scmp.ne.s32.totalorder %s50, %s51
      %p65 = scmp.eq.s32.totalorder %s20, 1
      %p66 = por %p64, %p65
      %p68 = scmp.ne.s32.totalorder %s51, %s67
      %p69 = scmp.eq.s32.totalorder %s20, 0
      %p70 = por %p68, %p69
      %s71 = ssub.s32 %s22, %s36
      %p72 = scmp.eq.s32.totalorder %s71, 0
      %s74 = sadd.s32 %s73, 1
      %s75 = scalar_select %p72, %s73, %s74
      %p78 = pneg %p72
      %p79 = scmp.eq.s32.totalorder %s14, 1
      %p80 = por %p78, %p79
      %p81 = scmp.ne.s32.totalorder %s73, %s76
      %p82 = scmp.eq.s32.totalorder %s14, 0
      %p83 = por %p81, %p82
      %p84 = scmp.ne.s32.totalorder %s73, %s76
      %p85 = scmp.eq.s32.totalorder %s19, 1
      %p86 = por %p84, %p85
      %p87 = scmp.ne.s32.totalorder %s76, %s77
      %p88 = scmp.eq.s32.totalorder %s19, 0
      %p89 = por %p87, %p88
      %p90 = scmp.ne.s32.totalorder %s76, %s77
      %p91 = scmp.eq.s32.totalorder %s20, 1
      %p92 = por %p90, %p91
      %p94 = scmp.ne.s32.totalorder %s77, %s93
      %p95 = scmp.eq.s32.totalorder %s20, 0
      %p96 = por %p94, %p95
      %s97 = ssub.s32 %s21, %s40
      %s98 = ssub.s32 %s23, %s32
      %s99 = sor.u32 %s97, %s98
      %s100 = ssub.s32 %s22, %s36
      %s101 = sor.u32 %s99, %s100
      %p102 = scmp.eq.s32.totalorder %s101, 0
      %s104 = sadd.s32 %s103, 1
      %s105 = scalar_select %p102, %s103, %s104
      %p108 = pneg %p102
      %p109 = scmp.eq.s32.totalorder %s14, 1
      %p110 = por %p108, %p109
      %p111 = scmp.ne.s32.totalorder %s103, %s106
      %p112 = scmp.eq.s32.totalorder %s14, 0
      %p113 = por %p111, %p112
      %p114 = scmp.ne.s32.totalorder %s103, %s106
      %p115 = scmp.eq.s32.totalorder %s19, 1
      %p116 = por %p114, %p115
      %p117 = scmp.ne.s32.totalorder %s106, %s107
      %p118 = scmp.eq.s32.totalorder %s19, 0
      %p119 = por %p117, %p118
      %p120 = scmp.ne.s32.totalorder %s106, %s107
      %p121 = scmp.eq.s32.totalorder %s20, 1
      %p122 = por %p120, %p121
      %p124 = scmp.ne.s32.totalorder %s107, %s123
      %p125 = scmp.eq.s32.totalorder %s20, 0
      %p126 = por %p124, %p125
      %p127 = scmp.le.s32.totalorder 1, %s14
      %p128 = scmp.lt.s32.totalorder %s14, 3
      %p129 = pnand %p127, %p128
      %p130 = pneg %p129
      // Predicated region
      $region9: #{tpu_custom_call.1} parent=5 // pred_check
        _
      $region10: #{tpu_custom_call.1} parent=5 // pred_check_branch
        %132 = sbr.rel (%p129) target = $region12
      $region11: #{tpu_custom_call.1} parent=5 // pred_region
        %s133 = ssub.s32 %s14, 1
        // Predicated region
        $region13: #{tpu_custom_call.1} parent=11 // pred_check
          %p134 = pneg %p89
        $region14: #{tpu_custom_call.1} parent=11 // pred_check_branch
          %136 = sbr.rel (%p134) target = $region16
        $region15: #{tpu_custom_call.1} parent=11 // pred_region
          %p137 = scmp.lt.s32.totalorder %s25, 0
          %s138 = scalar_select %p137, %s25, 0
          %s139 = scalar_lea.vmem %s1, %s138
        $region16: #{tpu_custom_call.1} parent=11 // pred_fallthru
          _
      $region12: #{tpu_custom_call.1} parent=5 // pred_fallthru
        _
      %p140 = scmp.lt.s32.totalorder %s14, 2
      // Predicated region
      $region17: #{tpu_custom_call.1} parent=5 // pred_check
        %p141 = pneg %p140
      $region18: #{tpu_custom_call.1} parent=5 // pred_check_branch
        %143 = sbr.rel (%p141) target = $region20
      $region19: #{tpu_custom_call.1} parent=5 // pred_region
        // Predicated region
        $region21: #{tpu_custom_call.1} parent=19 // pred_check
          %p144 = pneg %p57
        $region22: #{tpu_custom_call.1} parent=19 // pred_check_branch
          %146 = sbr.rel (%p144) target = $region24
        $region23: #{tpu_custom_call.1} parent=19 // pred_region
          %s147 = sand.u32 %s47, 1
          %s148 = scalar_lea.sflag [#allocation6], %s147
          %s149 = sand.u32 %s47, 1
          %s150 = smul.addr %s149, 8
          %s151 = scalar_lea.vmem [#allocation5], %s150
          %s153 = ssub.s32 128, 128
          %154 = vsyncadd %s148, %s153
          %s155 = sadd.s32 %s22, %s23
          %s156 = sadd.s32 %s155, %s21
          %s157 = smul.addr %s156, 128
          %s158 = scalar_lea.hbm %s0, %s157
          %s160 = sshll.u32 %s151, 4
          %s161 = int_to_ptr.vmem [resolvable:$true] %s160
          %163 = dma.hbm_to_vmem [thread:$0]  %s158, 128, %s161, %s148
        $region24: #{tpu_custom_call.1} parent=19 // pred_fallthru
          _
      $region20: #{tpu_custom_call.1} parent=5 // pred_fallthru
        _
      %p164 = scmp.le.s32.totalorder 1, %s14
      %p165 = scmp.lt.s32.totalorder %s14, 3
      %p166 = pnand %p164, %p165
      %p167 = pneg %p166
      // Predicated region
      $region25: #{tpu_custom_call.1} parent=5 // pred_check
        _
      $region26: #{tpu_custom_call.1} parent=5 // pred_check_branch
        %169 = sbr.rel (%p166) target = $region28
      $region27: #{tpu_custom_call.1} parent=5 // pred_region
        %s170 = ssub.s32 %s14, 1
        %s171 = sand.u32 %s50, 1
        %s172 = scalar_lea.sflag [#allocation6], %s171
        %s173 = sand.u32 %s50, 1
        %s174 = smul.addr %s173, 8
        %s175 = scalar_lea.vmem [#allocation5], %s174
        // Predicated region
        $region29: #{tpu_custom_call.1} parent=27 // pred_check
          %p176 = pneg %p63
        $region30: #{tpu_custom_call.1} parent=27 // pred_check_branch
          %178 = sbr.rel (%p176) target = $region32
        $region31: #{tpu_custom_call.1} parent=27 // pred_region
          %179 = dma.done %s172, 128
        $region32: #{tpu_custom_call.1} parent=27 // pred_fallthru
          _
        %s180 = sand.u32 %s50, 1
        %s181 = scalar_lea.sflag [#allocation6], %s180
        %s182 = sand.u32 %s50, 1
        %s183 = smul.addr %s182, 8
        %s184 = scalar_lea.vmem [#allocation5], %s183
        %p185 = pneg %p63
        %p186 = pneg %p60
        %p187 = scmp.lt.s32.totalorder %s25, 0
        %s188 = scalar_select %p187, %s25, 0
        %s189 = scalar_lea.vmem %s1, %s188
        %p190 = pneg %p89
        %p191 = pneg %p86
        %p192 = pneg %p119
        %p193 = pneg %p116
        %s194 = sand.u32 %s106, 1
        %s195 = scalar_lea.sflag [#allocation7], %s194
        %s196 = sand.u32 %s106, 1
        %s197 = smul.addr %s196, 8
        %s198 = scalar_lea.vmem [#allocation8], %s197
        %p199 = scmp.lt.s32.totalorder %s25, 0
        %s200 = scalar_select %p199, %s25, 0
        %s201 = scalar_lea.vmem %s1, %s200
        %p202 = scmp.eq.s32.totalorder %s26, 0
        // Predicated region
        $region33: #{tpu_custom_call.1} parent=27 // pred_check
          %p203 = pneg %p202
        $region34: #{tpu_custom_call.1} parent=27 // pred_check_branch
          %205 = sbr.rel (%p203) target = $region36
        $region35: #{tpu_custom_call.1} parent=27 // pred_region
          %vm206 = vcmask 253952
          %207 = vst.msk [vmem:[#allocation2] sm:$0x1] %vm206, 0.0
        $region36: #{tpu_custom_call.1} parent=27 // pred_fallthru
          _
        %v208 = vld [vmem:[%s175] sm:$0xff]
        %v209 = vcombine.high %v208, 0.0
        %v211 = vunpack.c.l.s4 1983009808
        %v212 = vunpack.c.0.s8 %v211
        %v213 = vlaneseq
        %v214 = vshrl.u32 %v213, 7
        %v215 = vsub.s32 %v212, %v214
        %v216 = vrot.slane %v208, %v215
        %v218 = vunpack.c.l.s4 1983009808
        %v219 = vunpack.c.0.s8 %v218
        %v220 = vlaneseq
        %v221 = vshrl.u32 %v220, 7
        %v222 = vsub.s32 %v219, %v221
        %v223 = vrot.slane %v209, %v222
        %v224 = vcombine.high %v216, 0.0
        %v226 = vunpack.c.l.s4 1934713408
        %v227 = vunpack.c.0.s8 %v226
        %v228 = vlaneseq
        %v229 = vshrl.u32 %v228, 7
        %v230 = vsub.s32 %v227, %v229
        %v231 = vrot.slane %v216, %v230
        %v233 = vunpack.c.l.s4 1934713408
        %v234 = vunpack.c.0.s8 %v233
        %v235 = vlaneseq
        %v236 = vshrl.u32 %v235, 7
        %v237 = vsub.s32 %v234, %v236
        %v238 = vrot.slane %v224, %v237
        %v239 = vcombine.high %v223, 0.0
        %v241 = vunpack.c.l.s4 1934713408
        %v242 = vunpack.c.0.s8 %v241
        %v243 = vlaneseq
        %v244 = vshrl.u32 %v243, 7
        %v245 = vsub.s32 %v242, %v244
        %v246 = vrot.slane %v223, %v245
        %v248 = vunpack.c.l.s4 1934713408
        %v249 = vunpack.c.0.s8 %v248
        %v250 = vlaneseq
        %v251 = vshrl.u32 %v250, 7
        %v252 = vsub.s32 %v249, %v251
        %v253 = vrot.slane %v239, %v252
        %v254 = vcombine.high %v231, 0.0
        %v255 = vcombine.high %v238, 0.0
        %v256 = vcombine.high %v246, 0.0
        %v257 = vcombine.high %v253, 0.0
        %vm258 = vcmask 253952
        %259 = vst.msk [vmem:[#allocation3] sm:$0x1] %vm258, %v231
        %260 = vst.msk [vmem:[#allocation3 + $0x1] sm:$0x1] %vm258, %v254
        %261 = vst.msk [vmem:[#allocation3 + $0x2] sm:$0x1] %vm258, %v238
        %262 = vst.msk [vmem:[#allocation3 + $0x3] sm:$0x1] %vm258, %v255
        %263 = vst.msk [vmem:[#allocation3 + $0x4] sm:$0x1] %vm258, %v246
        %264 = vst.msk [vmem:[#allocation3 + $0x5] sm:$0x1] %vm258, %v256
        %265 = vst.msk [vmem:[#allocation3 + $0x6] sm:$0x1] %vm258, %v253
        %266 = vst.msk [vmem:[#allocation3 + $0x7] sm:$0x1] %vm258, %v257
        %v267 = vld [vmem:[%s201] sm:$0x1]
        %v268 = vld [vmem:[#allocation2] sm:$0x1]
        %v269 = vld [vmem:[#allocation3] sm:$0x1]
        %vm270 = vcmp.gt.f32.partialorder %v269, %v268
        %v271 = vsel %vm270, 1.0, 0.0
        %272 = vst.msk [vmem:[#allocation4] sm:$0x1] %vm258, %v271
        %v273 = vmul.f32 %v268, 0.95
        %v274 = vmul.f32 %v271, %v267
        %v275 = vadd.f32 %v273, %v274
        %s276 = scalar_lea.vmem [#allocation3], 1
        %v277 = vld [vmem:[%s276] sm:$0x1]
        %vm278 = vcmp.gt.f32.partialorder %v277, %v275
        %v279 = vsel %vm278, 1.0, 0.0
        %s280 = scalar_lea.vmem [#allocation4], 1
        %281 = vst.msk [vmem:[%s280] sm:$0x1] %vm258, %v279
        %v282 = vmul.f32 %v275, 0.95
        %v283 = vmul.f32 %v279, %v267
        %v284 = vadd.f32 %v282, %v283
        %s285 = scalar_lea.vmem [#allocation3], 2
        %v286 = vld [vmem:[%s285] sm:$0x1]
        %vm287 = vcmp.gt.f32.partialorder %v286, %v284
        %v288 = vsel %vm287, 1.0, 0.0
        %s289 = scalar_lea.vmem [#allocation4], 2
        %290 = vst.msk [vmem:[%s289] sm:$0x1] %vm258, %v288
        %v291 = vmul.f32 %v284, 0.95
        %v292 = vmul.f32 %v288, %v267
        %v293 = vadd.f32 %v291, %v292
        %s294 = scalar_lea.vmem [#allocation3], 3
        %v295 = vld [vmem:[%s294] sm:$0x1]
        %vm296 = vcmp.gt.f32.partialorder %v295, %v293
        %v297 = vsel %vm296, 1.0, 0.0
        %s298 = scalar_lea.vmem [#allocation4], 3
        %299 = vst.msk [vmem:[%s298] sm:$0x1] %vm258, %v297
        %v300 = vmul.f32 %v293, 0.95
        %v301 = vmul.f32 %v297, %v267
        %v302 = vadd.f32 %v300, %v301
        %s303 = scalar_lea.vmem [#allocation3], 4
        %v304 = vld [vmem:[%s303] sm:$0x1]
        %vm305 = vcmp.gt.f32.partialorder %v304, %v302
        %v306 = vsel %vm305, 1.0, 0.0
        %s307 = scalar_lea.vmem [#allocation4], 4
        %308 = vst.msk [vmem:[%s307] sm:$0x1] %vm258, %v306
        %v309 = vmul.f32 %v302, 0.95
        %v310 = vmul.f32 %v306, %v267
        %v311 = vadd.f32 %v309, %v310
        %s312 = scalar_lea.vmem [#allocation3], 5
        %v313 = vld [vmem:[%s312] sm:$0x1]
        %vm314 = vcmp.gt.f32.partialorder %v313, %v311
        %v315 = vsel %vm314, 1.0, 0.0
        %s316 = scalar_lea.vmem [#allocation4], 5
        %317 = vst.msk [vmem:[%s316] sm:$0x1] %vm258, %v315
        %v318 = vmul.f32 %v311, 0.95
        %v319 = vmul.f32 %v315, %v267
        %v320 = vadd.f32 %v318, %v319
        %s321 = scalar_lea.vmem [#allocation3], 6
        %v322 = vld [vmem:[%s321] sm:$0x1]
        %vm323 = vcmp.gt.f32.partialorder %v322, %v320
        %v324 = vsel %vm323, 1.0, 0.0
        %s325 = scalar_lea.vmem [#allocation4], 6
        %326 = vst.msk [vmem:[%s325] sm:$0x1] %vm258, %v324
        %v327 = vmul.f32 %v320, 0.95
        %v328 = vmul.f32 %v324, %v267
        %v329 = vadd.f32 %v327, %v328
        %s330 = scalar_lea.vmem [#allocation3], 7
        %v331 = vld [vmem:[%s330] sm:$0x1]
        %vm332 = vcmp.gt.f32.partialorder %v331, %v329
        %v333 = vsel %vm332, 1.0, 0.0
        %s334 = scalar_lea.vmem [#allocation4], 7
        %335 = vst.msk [vmem:[%s334] sm:$0x1] %vm258, %v333
        %v336 = vmul.f32 %v329, 0.95
        %v337 = vmul.f32 %v333, %v267
        %v338 = vadd.f32 %v336, %v337
        %339 = vst.msk [vmem:[#allocation2] sm:$0x1] %vm258, %v338
        %v340 = vld [vmem:[#allocation4] sm:$0x1]
        %v341 = vld [vmem:[#allocation4 + $0x1] sm:$0x1]
        %v342 = vld [vmem:[#allocation4 + $0x2] sm:$0x1]
        %v343 = vld [vmem:[#allocation4 + $0x3] sm:$0x1]
        %v344 = vld [vmem:[#allocation4 + $0x4] sm:$0x1]
        %v345 = vld [vmem:[#allocation4 + $0x5] sm:$0x1]
        %v346 = vld [vmem:[#allocation4 + $0x6] sm:$0x1]
        %v347 = vld [vmem:[#allocation4 + $0x7] sm:$0x1]
        %v356 = vcombine.low %v340, %v341
        %v357 = vcombine.low %v342, %v343
        %v358 = vcombine.low %v344, %v345
        %v359 = vcombine.low %v346, %v347
        %v361 = vunpack.c.l.s4 1966171168
        %v362 = vunpack.c.0.s8 %v361
        %v363 = vlaneseq
        %v364 = vshrl.u32 %v363, 7
        %v365 = vsub.s32 %v362, %v364
        %v366 = vrot.slane %v356, %v365
        %v368 = vunpack.c.l.s4 1966171168
        %v369 = vunpack.c.0.s8 %v368
        %v370 = vlaneseq
        %v371 = vshrl.u32 %v370, 7
        %v372 = vsub.s32 %v369, %v371
        %v373 = vrot.slane %v357, %v372
        %v375 = vunpack.c.l.s4 1966171168
        %v376 = vunpack.c.0.s8 %v375
        %v377 = vlaneseq
        %v378 = vshrl.u32 %v377, 7
        %v379 = vsub.s32 %v376, %v378
        %v380 = vrot.slane %v358, %v379
        %v382 = vunpack.c.l.s4 1966171168
        %v383 = vunpack.c.0.s8 %v382
        %v384 = vlaneseq
        %v385 = vshrl.u32 %v384, 7
        %v386 = vsub.s32 %v383, %v385
        %v387 = vrot.slane %v359, %v386
        %v388 = vcombine.low %v366, %v373
        %v389 = vcombine.low %v380, %v387
        %v391 = vunpack.c.l.s4 1966171168
        %v392 = vunpack.c.0.s8 %v391
        %v393 = vlaneseq
        %v394 = vshrl.u32 %v393, 7
        %v395 = vsub.s32 %v392, %v394
        %v396 = vrot.slane %v388, %v395
        %v398 = vunpack.c.l.s4 1966171168
        %v399 = vunpack.c.0.s8 %v398
        %v400 = vlaneseq
        %v401 = vshrl.u32 %v400, 7
        %v402 = vsub.s32 %v399, %v401
        %v403 = vrot.slane %v389, %v402
        %v404 = vcombine.low %v396, %v403
        %vm406 = vcmask 261120
        %407 = vst.msk [vmem:[%s198] sm:$0xff] %vm406, %v404
        %s408 = sand.u32 %s106, 1
        %s409 = scalar_lea.sflag [#allocation7], %s408
        %s410 = sand.u32 %s106, 1
        %s411 = smul.addr %s410, 8
        %s412 = scalar_lea.vmem [#allocation8], %s411
        // Predicated region
        $region37: #{tpu_custom_call.1} parent=27 // pred_check
          %p413 = pneg %p116
        $region38: #{tpu_custom_call.1} parent=27 // pred_check_branch
          %415 = sbr.rel (%p413) target = $region40
        $region39: #{tpu_custom_call.1} parent=27 // pred_region
          %s417 = ssub.s32 128, 128
          %418 = vsyncadd %s409, %s417
          %s419 = sadd.s32 %s25, %s26
          %s420 = sadd.s32 %s419, %s24
          %s421 = smul.addr %s420, 128
          %s422 = scalar_lea.hbm %s2, %s421
          %s424 = sshll.u32 %s412, 4
          %s425 = int_to_ptr.vmem [resolvable:$true] %s424
          %427 = dma.vmem_to_hbm [thread:$0]  %s425, 128, %s422, %s409
        $region40: #{tpu_custom_call.1} parent=27 // pred_fallthru
          _
      $region28: #{tpu_custom_call.1} parent=5 // pred_fallthru
        _
      %p428 = scmp.le.s32.totalorder 2, %s14
      // Predicated region
      $region41: #{tpu_custom_call.1} parent=5 // pred_check
        %p429 = pneg %p428
      $region42: #{tpu_custom_call.1} parent=5 // pred_check_branch
        %431 = sbr.rel (%p429) target = $region44
      $region43: #{tpu_custom_call.1} parent=5 // pred_region
        %s432 = ssub.s32 %s14, 2
        // Predicated region
        $region45: #{tpu_custom_call.1} parent=43 // pred_check
          %p433 = pneg %p122
        $region46: #{tpu_custom_call.1} parent=43 // pred_check_branch
          %435 = sbr.rel (%p433) target = $region48
        $region47: #{tpu_custom_call.1} parent=43 // pred_region
          %s436 = sand.u32 %s107, 1
          %s437 = scalar_lea.sflag [#allocation7], %s436
          %s438 = sand.u32 %s107, 1
          %s439 = smul.addr %s438, 8
          %s440 = scalar_lea.vmem [#allocation8], %s439
          %441 = dma.done %s437, 128
        $region48: #{tpu_custom_call.1} parent=43 // pred_fallthru
          _
      $region44: #{tpu_custom_call.1} parent=5 // pred_fallthru
        _
    $region6: #{tpu_custom_call.1} parent=1 // loop_footer
      %s18 = sadd.s32 1, %s14
    $region7: #{tpu_custom_call.1} parent=1 // loop_footer_branch
      %13 = sbr.rel target = $region3
    $region8: #{tpu_custom_call.1} parent=1 // loop_exit
      _
    %442 = vsyncpa [#allocation6], 1
    %s443 = scalar_lea.sflag [#allocation6], 1
    %444 = vsyncpa %s443, 1
    %445 = vsyncpa [#allocation7], 1
    %s446 = scalar_lea.sflag [#allocation7], 1
    %447 = vsyncpa %s446, 1

</llo_original>
